<compile_context>
chip_gen: v6e
topology: v6e:2x2x1
jax: 0.10.0
libtpu: 0.0.40
codegen_flags: <defaults>
</compile_context>

<pallas_src>
from functools import partial

import jax
import jax.numpy as jnp
from jax.experimental import pallas as pl
from jax.experimental.pallas import tpu as pltpu


def _embed_kernel(x_ref, w_ref, pos_ref, o_ref, *, mxu_dtype):
    # x_ref:   (1, C, R, P, Wp, P)  pixel patch-row tile, native dtype
    # w_ref:   (K, E)               conv weight, (K, E) orientation, K=(C,P,P)
    # pos_ref: (R, Wp, E)           positional embedding (+ folded conv bias)
    # o_ref:   (1, R, Wp, E)
    _, C, R, P, Wp, _ = x_ref.shape
    w = w_ref[...]
    for r in range(R):            # static unroll: R patch rows per grid step
        # Build the (Wp, K) patch tile: the K-column block (c*P + pr)*P + pc
        # is exactly the natural (Wp, P) tile x[c, r, pr] -> static slices
        # plus one lane-axis concat; no transposes, no lane->sublane folds.
        pieces = [x_ref[0, c, r, pr] for c in range(C) for pr in range(P)]
        lhs = jnp.concatenate(pieces, axis=-1)                      # (Wp, K)
        if mxu_dtype is not None:
            lhs = lhs.astype(mxu_dtype)
        acc = jnp.dot(lhs, w, preferred_element_type=jnp.float32)   # (Wp, E) f32
        acc = acc + pos_ref[r].astype(jnp.float32)
        o_ref[0, r] = acc.astype(o_ref.dtype)


def siglip_vision_embeddings(pixel_values, conv_weight, conv_bias, pos_embedding,
                             patch_size, *, patch_rows_per_step=None,
                             mxu_dtype=None):
    """SigLipVisionEmbeddings.forward.

    pixel_values:  (B, C, H, W)   NCHW image batch
    conv_weight:   (E, C, P, P)   nn.Conv2d weight (stride == kernel == P)
    conv_bias:     (E,)
    pos_embedding: (N, E)         nn.Embedding table, N = (H//P) * (W//P)
    Returns (B, N, E).
    """
    B, C, H, W = pixel_values.shape
    E = conv_weight.shape[0]
    P = patch_size
    Hp, Wp = H // P, W // P
    N = Hp * Wp
    K = C * P * P
    out_dtype = jnp.result_type(pixel_values.dtype, conv_weight.dtype)

    # padding='valid': drop the ragged border.  Zero cost when H, W are
    # multiples of P; otherwise one fused slice+reshape pass over the pixels.
    if H != Hp * P or W != Wp * P:
        pixel_values = pixel_values[:, :, :Hp * P, :Wp * P]

    # Free contiguous reshape: no transpose, no patch materialization in HBM.
    x6 = pixel_values.reshape(B, C, Hp, P, Wp, P)

    # One-time (small) weight transform to (K, E); in deployment this would be
    # cached with the weights.  K order is (C, P, P) = native Conv2d layout.
    w_ke = conv_weight.reshape(E, K).T
    if mxu_dtype is not None:
        w_ke = w_ke.astype(mxu_dtype)

    # Fold the conv bias into the positional table once.
    pos3 = pos_embedding.reshape(Hp, Wp, E) + conv_bias[None, None, :]

    # Patch-row tile height R: largest divisor of Hp not exceeding the target,
    # so the grid divides exactly (no padding, no ragged tile, no masked
    # stores, no post-call slice).
    if patch_rows_per_step is None:
        patch_rows_per_step = max(1, 256 // max(Wp, 1))   # ~256 patches / step
    R = 1
    for cand in range(min(Hp, patch_rows_per_step), 0, -1):
        if Hp % cand == 0:
            R = cand
            break
    n_tiles = Hp // R

    out = pl.pallas_call(
        partial(_embed_kernel, mxu_dtype=mxu_dtype),
        out_shape=jax.ShapeDtypeStruct((B, Hp, Wp, E), out_dtype),
        grid_spec=pltpu.PrefetchScalarGridSpec(
            num_scalar_prefetch=0,
            # Tile-major grid: weight / pos block indices do not change with b,
            # so those tiles stay resident across the whole batch.
            grid=(n_tiles, B),
            in_specs=[
                pl.BlockSpec((1, C, R, P, Wp, P),
                             lambda t, b: (b, 0, t, 0, 0, 0)),       # pixels
                pl.BlockSpec((K, E), lambda t, b: (0, 0)),           # weight
                pl.BlockSpec((R, Wp, E), lambda t, b: (t, 0, 0)),    # pos+bias
            ],
            out_specs=pl.BlockSpec((1, R, Wp, E),
                                   lambda t, b: (b, t, 0, 0)),
        ),
        compiler_params=pltpu.CompilerParams(
            dimension_semantics=("parallel", "parallel")),
    )(x6, w_ke, pos3)

    return out.reshape(B, N, E)   # free contiguous reshape


def _reference(pixel_values, conv_weight, conv_bias, pos_embedding, P):
    """Pure-JAX reference == PyTorch Conv2d(stride=P, padding='valid') + pos."""
    out = jax.lax.conv_general_dilated(
        pixel_values.astype(jnp.float32), conv_weight.astype(jnp.float32),
        window_strides=(P, P), padding="VALID",
        dimension_numbers=("NCHW", "OIHW", "NCHW"))
    B, E, Hp, Wp = out.shape
    out = out + conv_bias.astype(jnp.float32).reshape(1, E, 1, 1)
    out = out.reshape(B, E, Hp * Wp).transpose(0, 2, 1)
    return out + pos_embedding.astype(jnp.float32)[None]


if __name__ == "__main__":
    # Small config consistent with the module: image 16x16, patch 4 -> 16 patches.
    B, C, IMG, P, E = 2, 3, 16, 4, 32
    Hp = IMG // P
    N = Hp * Hp

    key = jax.random.PRNGKey(0)
    k_pix, k_w, k_b, k_pos, k_rag = jax.random.split(key, 5)
    pixel_values = jax.random.normal(k_pix, (B, C, IMG, IMG), dtype=jnp.float32)
    conv_weight = jax.random.normal(k_w, (E, C, P, P), dtype=jnp.float32) * 0.02
    conv_bias = jax.random.normal(k_b, (E,), dtype=jnp.float32) * 0.02
    pos_embedding = jax.random.normal(k_pos, (N, E), dtype=jnp.float32) * 0.02

    # 1) f32 path.
    out = siglip_vision_embeddings(pixel_values, conv_weight, conv_bias,
                                   pos_embedding, patch_size=P)
    out = jax.block_until_ready(out)
    ref = _reference(pixel_values, conv_weight, conv_bias, pos_embedding, P)
    assert out.shape == (B, N, E)
    assert jnp.allclose(out, ref, atol=1e-4, rtol=1e-4)

    # 2) Ragged image (image not a multiple of patch): 'valid' drops the border.
    pixel_rag = jax.random.normal(k_rag, (B, C, IMG + 2, IMG + 2), dtype=jnp.float32)
    out_rag = siglip_vision_embeddings(pixel_rag, conv_weight, conv_bias,
                                       pos_embedding, patch_size=P)
    out_rag = jax.block_until_ready(out_rag)
    ref_rag = _reference(pixel_rag, conv_weight, conv_bias, pos_embedding, P)
    assert out_rag.shape == (B, N, E)
    assert jnp.allclose(out_rag, ref_rag, atol=1e-4, rtol=1e-4)

    # 3) Native bf16 params/activations (full-rate MXU, f32 accumulation).
    out_bf16 = siglip_vision_embeddings(
        pixel_values.astype(jnp.bfloat16), conv_weight.astype(jnp.bfloat16),
        conv_bias.astype(jnp.bfloat16), pos_embedding.astype(jnp.bfloat16),
        patch_size=P)
    out_bf16 = jax.block_until_ready(out_bf16)
    assert out_bf16.dtype == jnp.bfloat16
    assert jnp.allclose(out_bf16.astype(jnp.float32), ref, atol=3e-2, rtol=3e-2)

    # 4) f32 inputs with bf16 MXU operands (v5e/v6e recommendation), f32 output.
    out_mxu = siglip_vision_embeddings(pixel_values, conv_weight, conv_bias,
                                       pos_embedding, patch_size=P,
                                       mxu_dtype=jnp.bfloat16)
    out_mxu = jax.block_until_ready(out_mxu)
    assert out_mxu.dtype == jnp.float32
    assert jnp.allclose(out_mxu, ref, atol=3e-2, rtol=3e-2)

    print("KERNEL_OK")
</pallas_src>

<mosaic_0001>
module attributes {stable_mosaic.version = 11 : i64} {
  func.func @_embed_kernel(%arg0: i32, %arg1: i32, %arg2: memref<1x3x4x4x4x4xf32, #tpu.memory_space<vmem>>, %arg3: memref<48x32xf32, #tpu.memory_space<vmem>>, %arg4: memref<4x4x32xf32, #tpu.memory_space<vmem>>, %arg5: memref<1x4x4x32xf32, #tpu.memory_space<vmem>>) attributes {dimension_semantics = [#tpu.dimension_semantics<parallel>, #tpu.dimension_semantics<parallel>], iteration_bounds = array<i64: 1, 2>, scalar_prefetch = 0 : i64, scratch_operands = 0 : i64, tpu.core_type = #tpu.core_type<tc>, window_params = [{transform_indices = @transform_0, window_bounds = array<i64: 1, 3, 4, 4, 4, 4>}, {pipeline_mode = #tpu.pipeline_mode<synchronous>, transform_indices = @transform_1, window_bounds = array<i64: 48, 32>}, {transform_indices = @transform_2, window_bounds = array<i64: 4, 4, 32>}, {transform_indices = @transform_3, window_bounds = array<i64: 1, 4, 4, 32>}]} {
    %c0 = arith.constant 0 : index
    %c0_0 = arith.constant 0 : index
    %0 = vector.load %arg3[%c0, %c0_0] : memref<48x32xf32, #tpu.memory_space<vmem>>, vector<48x32xf32>
    %c0_1 = arith.constant 0 : index
    %c0_2 = arith.constant 0 : index
    %c0_3 = arith.constant 0 : index
    %c0_4 = arith.constant 0 : index
    %c0_5 = arith.constant 0 : index
    %c0_6 = arith.constant 0 : index
    %1 = vector.load %arg2[%c0_1, %c0_2, %c0_3, %c0_4, %c0_5, %c0_6] : memref<1x3x4x4x4x4xf32, #tpu.memory_space<vmem>>, vector<1x1x1x1x4x4xf32>
    %2 = vector.shape_cast %1 : vector<1x1x1x1x4x4xf32> to vector<4x4xf32>
    %c0_7 = arith.constant 0 : index
    %c0_8 = arith.constant 0 : index
    %c0_9 = arith.constant 0 : index
    %c1 = arith.constant 1 : index
    %c0_10 = arith.constant 0 : index
    %c0_11 = arith.constant 0 : index
    %3 = vector.load %arg2[%c0_7, %c0_8, %c0_9, %c1, %c0_10, %c0_11] : memref<1x3x4x4x4x4xf32, #tpu.memory_space<vmem>>, vector<1x1x1x1x4x4xf32>
    %4 = vector.shape_cast %3 : vector<1x1x1x1x4x4xf32> to vector<4x4xf32>
    %c0_12 = arith.constant 0 : index
    %c0_13 = arith.constant 0 : index
    %c0_14 = arith.constant 0 : index
    %c2 = arith.constant 2 : index
    %c0_15 = arith.constant 0 : index
    %c0_16 = arith.constant 0 : index
    %5 = vector.load %arg2[%c0_12, %c0_13, %c0_14, %c2, %c0_15, %c0_16] : memref<1x3x4x4x4x4xf32, #tpu.memory_space<vmem>>, vector<1x1x1x1x4x4xf32>
    %6 = vector.shape_cast %5 : vector<1x1x1x1x4x4xf32> to vector<4x4xf32>
    %c0_17 = arith.constant 0 : index
    %c0_18 = arith.constant 0 : index
    %c0_19 = arith.constant 0 : index
    %c3 = arith.constant 3 : index
    %c0_20 = arith.constant 0 : index
    %c0_21 = arith.constant 0 : index
    %7 = vector.load %arg2[%c0_17, %c0_18, %c0_19, %c3, %c0_20, %c0_21] : memref<1x3x4x4x4x4xf32, #tpu.memory_space<vmem>>, vector<1x1x1x1x4x4xf32>
    %8 = vector.shape_cast %7 : vector<1x1x1x1x4x4xf32> to vector<4x4xf32>
    %c0_22 = arith.constant 0 : index
    %c1_23 = arith.constant 1 : index
    %c0_24 = arith.constant 0 : index
    %c0_25 = arith.constant 0 : index
    %c0_26 = arith.constant 0 : index
    %c0_27 = arith.constant 0 : index
    %9 = vector.load %arg2[%c0_22, %c1_23, %c0_24, %c0_25, %c0_26, %c0_27] : memref<1x3x4x4x4x4xf32, #tpu.memory_space<vmem>>, vector<1x1x1x1x4x4xf32>
    %10 = vector.shape_cast %9 : vector<1x1x1x1x4x4xf32> to vector<4x4xf32>
    %c0_28 = arith.constant 0 : index
    %c1_29 = arith.constant 1 : index
    %c0_30 = arith.constant 0 : index
    %c1_31 = arith.constant 1 : index
    %c0_32 = arith.constant 0 : index
    %c0_33 = arith.constant 0 : index
    %11 = vector.load %arg2[%c0_28, %c1_29, %c0_30, %c1_31, %c0_32, %c0_33] : memref<1x3x4x4x4x4xf32, #tpu.memory_space<vmem>>, vector<1x1x1x1x4x4xf32>
    %12 = vector.shape_cast %11 : vector<1x1x1x1x4x4xf32> to vector<4x4xf32>
    %c0_34 = arith.constant 0 : index
    %c1_35 = arith.constant 1 : index
    %c0_36 = arith.constant 0 : index
    %c2_37 = arith.constant 2 : index
    %c0_38 = arith.constant 0 : index
    %c0_39 = arith.constant 0 : index
    %13 = vector.load %arg2[%c0_34, %c1_35, %c0_36, %c2_37, %c0_38, %c0_39] : memref<1x3x4x4x4x4xf32, #tpu.memory_space<vmem>>, vector<1x1x1x1x4x4xf32>
    %14 = vector.shape_cast %13 : vector<1x1x1x1x4x4xf32> to vector<4x4xf32>
    %c0_40 = arith.constant 0 : index
    %c1_41 = arith.constant 1 : index
    %c0_42 = arith.constant 0 : index
    %c3_43 = arith.constant 3 : index
    %c0_44 = arith.constant 0 : index
    %c0_45 = arith.constant 0 : index
    %15 = vector.load %arg2[%c0_40, %c1_41, %c0_42, %c3_43, %c0_44, %c0_45] : memref<1x3x4x4x4x4xf32, #tpu.memory_space<vmem>>, vector<1x1x1x1x4x4xf32>
    %16 = vector.shape_cast %15 : vector<1x1x1x1x4x4xf32> to vector<4x4xf32>
    %c0_46 = arith.constant 0 : index
    %c2_47 = arith.constant 2 : index
    %c0_48 = arith.constant 0 : index
    %c0_49 = arith.constant 0 : index
    %c0_50 = arith.constant 0 : index
    %c0_51 = arith.constant 0 : index
    %17 = vector.load %arg2[%c0_46, %c2_47, %c0_48, %c0_49, %c0_50, %c0_51] : memref<1x3x4x4x4x4xf32, #tpu.memory_space<vmem>>, vector<1x1x1x1x4x4xf32>
    %18 = vector.shape_cast %17 : vector<1x1x1x1x4x4xf32> to vector<4x4xf32>
    %c0_52 = arith.constant 0 : index
    %c2_53 = arith.constant 2 : index
    %c0_54 = arith.constant 0 : index
    %c1_55 = arith.constant 1 : index
    %c0_56 = arith.constant 0 : index
    %c0_57 = arith.constant 0 : index
    %19 = vector.load %arg2[%c0_52, %c2_53, %c0_54, %c1_55, %c0_56, %c0_57] : memref<1x3x4x4x4x4xf32, #tpu.memory_space<vmem>>, vector<1x1x1x1x4x4xf32>
    %20 = vector.shape_cast %19 : vector<1x1x1x1x4x4xf32> to vector<4x4xf32>
    %c0_58 = arith.constant 0 : index
    %c2_59 = arith.constant 2 : index
    %c0_60 = arith.constant 0 : index
    %c2_61 = arith.constant 2 : index
    %c0_62 = arith.constant 0 : index
    %c0_63 = arith.constant 0 : index
    %21 = vector.load %arg2[%c0_58, %c2_59, %c0_60, %c2_61, %c0_62, %c0_63] : memref<1x3x4x4x4x4xf32, #tpu.memory_space<vmem>>, vector<1x1x1x1x4x4xf32>
    %22 = vector.shape_cast %21 : vector<1x1x1x1x4x4xf32> to vector<4x4xf32>
    %c0_64 = arith.constant 0 : index
    %c2_65 = arith.constant 2 : index
    %c0_66 = arith.constant 0 : index
    %c3_67 = arith.constant 3 : index
    %c0_68 = arith.constant 0 : index
    %c0_69 = arith.constant 0 : index
    %23 = vector.load %arg2[%c0_64, %c2_65, %c0_66, %c3_67, %c0_68, %c0_69] : memref<1x3x4x4x4x4xf32, #tpu.memory_space<vmem>>, vector<1x1x1x1x4x4xf32>
    %24 = vector.shape_cast %23 : vector<1x1x1x1x4x4xf32> to vector<4x4xf32>
    %25 = tpu.concatenate %2, %4, %6, %8, %10, %12, %14, %16, %18, %20, %22, %24 in 1 : vector<4x4xf32>, vector<4x4xf32>, vector<4x4xf32>, vector<4x4xf32>, vector<4x4xf32>, vector<4x4xf32>, vector<4x4xf32>, vector<4x4xf32>, vector<4x4xf32>, vector<4x4xf32>, vector<4x4xf32>, vector<4x4xf32> -> vector<4x48xf32>
    %cst = arith.constant dense<0.000000e+00> : vector<4x32xf32>
    %26 = tpu.matmul %25, %0, %cst {dimension_numbers = #tpu.dot_dimension_numbers<[1], [0], [0], [1], [0, 0, 1, 1], [], []>} : vector<4x48xf32>, vector<48x32xf32>, vector<4x32xf32> -> vector<4x32xf32>
    %c0_70 = arith.constant 0 : index
    %c0_71 = arith.constant 0 : index
    %c0_72 = arith.constant 0 : index
    %27 = vector.load %arg4[%c0_70, %c0_71, %c0_72] : memref<4x4x32xf32, #tpu.memory_space<vmem>>, vector<1x4x32xf32>
    %28 = vector.shape_cast %27 : vector<1x4x32xf32> to vector<4x32xf32>
    %29 = arith.addf %26, %28 : vector<4x32xf32>
    %c0_73 = arith.constant 0 : index
    %c0_74 = arith.constant 0 : index
    %c0_75 = arith.constant 0 : index
    %c0_76 = arith.constant 0 : index
    %30 = vector.load %arg5[%c0_73, %c0_74, %c0_75, %c0_76] : memref<1x4x4x32xf32, #tpu.memory_space<vmem>>, vector<1x1x4x32xf32>
    %31 = vector.shape_cast %30 : vector<1x1x4x32xf32> to vector<4x32xf32>
    %32 = vector.shape_cast %29 : vector<4x32xf32> to vector<1x1x4x32xf32>
    tpu.vector_store %arg5[%c0_73, %c0_74, %c0_75, %c0_76], %32 {strides = array<i32>} : memref<1x4x4x32xf32, #tpu.memory_space<vmem>>, vector<1x1x4x32xf32>,
    %c0_77 = arith.constant 0 : index
    %c0_78 = arith.constant 0 : index
    %c1_79 = arith.constant 1 : index
    %c0_80 = arith.constant 0 : index
    %c0_81 = arith.constant 0 : index
    %c0_82 = arith.constant 0 : index
    %33 = vector.load %arg2[%c0_77, %c0_78, %c1_79, %c0_80, %c0_81, %c0_82] : memref<1x3x4x4x4x4xf32, #tpu.memory_space<vmem>>, vector<1x1x1x1x4x4xf32>
    %34 = vector.shape_cast %33 : vector<1x1x1x1x4x4xf32> to vector<4x4xf32>
    %c0_83 = arith.constant 0 : index
    %c0_84 = arith.constant 0 : index
    %c1_85 = arith.constant 1 : index
    %c1_86 = arith.constant 1 : index
    %c0_87 = arith.constant 0 : index
    %c0_88 = arith.constant 0 : index
    %35 = vector.load %arg2[%c0_83, %c0_84, %c1_85, %c1_86, %c0_87, %c0_88] : memref<1x3x4x4x4x4xf32, #tpu.memory_space<vmem>>, vector<1x1x1x1x4x4xf32>
    %36 = vector.shape_cast %35 : vector<1x1x1x1x4x4xf32> to vector<4x4xf32>
    %c0_89 = arith.constant 0 : index
    %c0_90 = arith.constant 0 : index
    %c1_91 = arith.constant 1 : index
    %c2_92 = arith.constant 2 : index
    %c0_93 = arith.constant 0 : index
    %c0_94 = arith.constant 0 : index
    %37 = vector.load %arg2[%c0_89, %c0_90, %c1_91, %c2_92, %c0_93, %c0_94] : memref<1x3x4x4x4x4xf32, #tpu.memory_space<vmem>>, vector<1x1x1x1x4x4xf32>
    %38 = vector.shape_cast %37 : vector<1x1x1x1x4x4xf32> to vector<4x4xf32>
    %c0_95 = arith.constant 0 : index
    %c0_96 = arith.constant 0 : index
    %c1_97 = arith.constant 1 : index
    %c3_98 = arith.constant 3 : index
    %c0_99 = arith.constant 0 : index
    %c0_100 = arith.constant 0 : index
    %39 = vector.load %arg2[%c0_95, %c0_96, %c1_97, %c3_98, %c0_99, %c0_100] : memref<1x3x4x4x4x4xf32, #tpu.memory_space<vmem>>, vector<1x1x1x1x4x4xf32>
    %40 = vector.shape_cast %39 : vector<1x1x1x1x4x4xf32> to vector<4x4xf32>
    %c0_101 = arith.constant 0 : index
    %c1_102 = arith.constant 1 : index
    %c1_103 = arith.constant 1 : index
    %c0_104 = arith.constant 0 : index
    %c0_105 = arith.constant 0 : index
    %c0_106 = arith.constant 0 : index
    %41 = vector.load %arg2[%c0_101, %c1_102, %c1_103, %c0_104, %c0_105, %c0_106] : memref<1x3x4x4x4x4xf32, #tpu.memory_space<vmem>>, vector<1x1x1x1x4x4xf32>
    %42 = vector.shape_cast %41 : vector<1x1x1x1x4x4xf32> to vector<4x4xf32>
    %c0_107 = arith.constant 0 : index
    %c1_108 = arith.constant 1 : index
    %c1_109 = arith.constant 1 : index
    %c1_110 = arith.constant 1 : index
    %c0_111 = arith.constant 0 : index
    %c0_112 = arith.constant 0 : index
    %43 = vector.load %arg2[%c0_107, %c1_108, %c1_109, %c1_110, %c0_111, %c0_112] : memref<1x3x4x4x4x4xf32, #tpu.memory_space<vmem>>, vector<1x1x1x1x4x4xf32>
    %44 = vector.shape_cast %43 : vector<1x1x1x1x4x4xf32> to vector<4x4xf32>
    %c0_113 = arith.constant 0 : index
    %c1_114 = arith.constant 1 : index
    %c1_115 = arith.constant 1 : index
    %c2_116 = arith.constant 2 : index
    %c0_117 = arith.constant 0 : index
    %c0_118 = arith.constant 0 : index
    %45 = vector.load %arg2[%c0_113, %c1_114, %c1_115, %c2_116, %c0_117, %c0_118] : memref<1x3x4x4x4x4xf32, #tpu.memory_space<vmem>>, vector<1x1x1x1x4x4xf32>
    %46 = vector.shape_cast %45 : vector<1x1x1x1x4x4xf32> to vector<4x4xf32>
    %c0_119 = arith.constant 0 : index
    %c1_120 = arith.constant 1 : index
    %c1_121 = arith.constant 1 : index
    %c3_122 = arith.constant 3 : index
    %c0_123 = arith.constant 0 : index
    %c0_124 = arith.constant 0 : index
    %47 = vector.load %arg2[%c0_119, %c1_120, %c1_121, %c3_122, %c0_123, %c0_124] : memref<1x3x4x4x4x4xf32, #tpu.memory_space<vmem>>, vector<1x1x1x1x4x4xf32>
    %48 = vector.shape_cast %47 : vector<1x1x1x1x4x4xf32> to vector<4x4xf32>
    %c0_125 = arith.constant 0 : index
    %c2_126 = arith.constant 2 : index
    %c1_127 = arith.constant 1 : index
    %c0_128 = arith.constant 0 : index
    %c0_129 = arith.constant 0 : index
    %c0_130 = arith.constant 0 : index
    %49 = vector.load %arg2[%c0_125, %c2_126, %c1_127, %c0_128, %c0_129, %c0_130] : memref<1x3x4x4x4x4xf32, #tpu.memory_space<vmem>>, vector<1x1x1x1x4x4xf32>
    %50 = vector.shape_cast %49 : vector<1x1x1x1x4x4xf32> to vector<4x4xf32>
    %c0_131 = arith.constant 0 : index
    %c2_132 = arith.constant 2 : index
    %c1_133 = arith.constant 1 : index
    %c1_134 = arith.constant 1 : index
    %c0_135 = arith.constant 0 : index
    %c0_136 = arith.constant 0 : index
    %51 = vector.load %arg2[%c0_131, %c2_132, %c1_133, %c1_134, %c0_135, %c0_136] : memref<1x3x4x4x4x4xf32, #tpu.memory_space<vmem>>, vector<1x1x1x1x4x4xf32>
    %52 = vector.shape_cast %51 : vector<1x1x1x1x4x4xf32> to vector<4x4xf32>
    %c0_137 = arith.constant 0 : index
    %c2_138 = arith.constant 2 : index
    %c1_139 = arith.constant 1 : index
    %c2_140 = arith.constant 2 : index
    %c0_141 = arith.constant 0 : index
    %c0_142 = arith.constant 0 : index
    %53 = vector.load %arg2[%c0_137, %c2_138, %c1_139, %c2_140, %c0_141, %c0_142] : memref<1x3x4x4x4x4xf32, #tpu.memory_space<vmem>>, vector<1x1x1x1x4x4xf32>
    %54 = vector.shape_cast %53 : vector<1x1x1x1x4x4xf32> to vector<4x4xf32>
    %c0_143 = arith.constant 0 : index
    %c2_144 = arith.constant 2 : index
    %c1_145 = arith.constant 1 : index
    %c3_146 = arith.constant 3 : index
    %c0_147 = arith.constant 0 : index
    %c0_148 = arith.constant 0 : index
    %55 = vector.load %arg2[%c0_143, %c2_144, %c1_145, %c3_146, %c0_147, %c0_148] : memref<1x3x4x4x4x4xf32, #tpu.memory_space<vmem>>, vector<1x1x1x1x4x4xf32>
    %56 = vector.shape_cast %55 : vector<1x1x1x1x4x4xf32> to vector<4x4xf32>
    %57 = tpu.concatenate %34, %36, %38, %40, %42, %44, %46, %48, %50, %52, %54, %56 in 1 : vector<4x4xf32>, vector<4x4xf32>, vector<4x4xf32>, vector<4x4xf32>, vector<4x4xf32>, vector<4x4xf32>, vector<4x4xf32>, vector<4x4xf32>, vector<4x4xf32>, vector<4x4xf32>, vector<4x4xf32>, vector<4x4xf32> -> vector<4x48xf32>
    %cst_149 = arith.constant dense<0.000000e+00> : vector<4x32xf32>
    %58 = tpu.matmul %57, %0, %cst_149 {dimension_numbers = #tpu.dot_dimension_numbers<[1], [0], [0], [1], [0, 0, 1, 1], [], []>} : vector<4x48xf32>, vector<48x32xf32>, vector<4x32xf32> -> vector<4x32xf32>
    %c1_150 = arith.constant 1 : index
    %c0_151 = arith.constant 0 : index
    %c0_152 = arith.constant 0 : index
    %59 = vector.load %arg4[%c1_150, %c0_151, %c0_152] : memref<4x4x32xf32, #tpu.memory_space<vmem>>, vector<1x4x32xf32>
    %60 = vector.shape_cast %59 : vector<1x4x32xf32> to vector<4x32xf32>
    %61 = arith.addf %58, %60 : vector<4x32xf32>
    %c0_153 = arith.constant 0 : index
    %c1_154 = arith.constant 1 : index
    %c0_155 = arith.constant 0 : index
    %c0_156 = arith.constant 0 : index
    %62 = vector.load %arg5[%c0_153, %c1_154, %c0_155, %c0_156] : memref<1x4x4x32xf32, #tpu.memory_space<vmem>>, vector<1x1x4x32xf32>
    %63 = vector.shape_cast %62 : vector<1x1x4x32xf32> to vector<4x32xf32>
    %64 = vector.shape_cast %61 : vector<4x32xf32> to vector<1x1x4x32xf32>
    tpu.vector_store %arg5[%c0_153, %c1_154, %c0_155, %c0_156], %64 {strides = array<i32>} : memref<1x4x4x32xf32, #tpu.memory_space<vmem>>, vector<1x1x4x32xf32>,
    %c0_157 = arith.constant 0 : index
    %c0_158 = arith.constant 0 : index
    %c2_159 = arith.constant 2 : index
    %c0_160 = arith.constant 0 : index
    %c0_161 = arith.constant 0 : index
    %c0_162 = arith.constant 0 : index
    %65 = vector.load %arg2[%c0_157, %c0_158, %c2_159, %c0_160, %c0_161, %c0_162] : memref<1x3x4x4x4x4xf32, #tpu.memory_space<vmem>>, vector<1x1x1x1x4x4xf32>
    %66 = vector.shape_cast %65 : vector<1x1x1x1x4x4xf32> to vector<4x4xf32>
    %c0_163 = arith.constant 0 : index
    %c0_164 = arith.constant 0 : index
    %c2_165 = arith.constant 2 : index
    %c1_166 = arith.constant 1 : index
    %c0_167 = arith.constant 0 : index
    %c0_168 = arith.constant 0 : index
    %67 = vector.load %arg2[%c0_163, %c0_164, %c2_165, %c1_166, %c0_167, %c0_168] : memref<1x3x4x4x4x4xf32, #tpu.memory_space<vmem>>, vector<1x1x1x1x4x4xf32>
    %68 = vector.shape_cast %67 : vector<1x1x1x1x4x4xf32> to vector<4x4xf32>
    %c0_169 = arith.constant 0 : index
    %c0_170 = arith.constant 0 : index
    %c2_171 = arith.constant 2 : index
    %c2_172 = arith.constant 2 : index
    %c0_173 = arith.constant 0 : index
    %c0_174 = arith.constant 0 : index
    %69 = vector.load %arg2[%c0_169, %c0_170, %c2_171, %c2_172, %c0_173, %c0_174] : memref<1x3x4x4x4x4xf32, #tpu.memory_space<vmem>>, vector<1x1x1x1x4x4xf32>
    %70 = vector.shape_cast %69 : vector<1x1x1x1x4x4xf32> to vector<4x4xf32>
    %c0_175 = arith.constant 0 : index
    %c0_176 = arith.constant 0 : index
    %c2_177 = arith.constant 2 : index
    %c3_178 = arith.constant 3 : index
    %c0_179 = arith.constant 0 : index
    %c0_180 = arith.constant 0 : index
    %71 = vector.load %arg2[%c0_175, %c0_176, %c2_177, %c3_178, %c0_179, %c0_180] : memref<1x3x4x4x4x4xf32, #tpu.memory_space<vmem>>, vector<1x1x1x1x4x4xf32>
    %72 = vector.shape_cast %71 : vector<1x1x1x1x4x4xf32> to vector<4x4xf32>
    %c0_181 = arith.constant 0 : index
    %c1_182 = arith.constant 1 : index
    %c2_183 = arith.constant 2 : index
    %c0_184 = arith.constant 0 : index
    %c0_185 = arith.constant 0 : index
    %c0_186 = arith.constant 0 : index
    %73 = vector.load %arg2[%c0_181, %c1_182, %c2_183, %c0_184, %c0_185, %c0_186] : memref<1x3x4x4x4x4xf32, #tpu.memory_space<vmem>>, vector<1x1x1x1x4x4xf32>
    %74 = vector.shape_cast %73 : vector<1x1x1x1x4x4xf32> to vector<4x4xf32>
    %c0_187 = arith.constant 0 : index
    %c1_188 = arith.constant 1 : index
    %c2_189 = arith.constant 2 : index
    %c1_190 = arith.constant 1 : index
    %c0_191 = arith.constant 0 : index
    %c0_192 = arith.constant 0 : index
    %75 = vector.load %arg2[%c0_187, %c1_188, %c2_189, %c1_190, %c0_191, %c0_192] : memref<1x3x4x4x4x4xf32, #tpu.memory_space<vmem>>, vector<1x1x1x1x4x4xf32>
    %76 = vector.shape_cast %75 : vector<1x1x1x1x4x4xf32> to vector<4x4xf32>
    %c0_193 = arith.constant 0 : index
    %c1_194 = arith.constant 1 : index
    %c2_195 = arith.constant 2 : index
    %c2_196 = arith.constant 2 : index
    %c0_197 = arith.constant 0 : index
    %c0_198 = arith.constant 0 : index
    %77 = vector.load %arg2[%c0_193, %c1_194, %c2_195, %c2_196, %c0_197, %c0_198] : memref<1x3x4x4x4x4xf32, #tpu.memory_space<vmem>>, vector<1x1x1x1x4x4xf32>
    %78 = vector.shape_cast %77 : vector<1x1x1x1x4x4xf32> to vector<4x4xf32>
    %c0_199 = arith.constant 0 : index
    %c1_200 = arith.constant 1 : index
    %c2_201 = arith.constant 2 : index
    %c3_202 = arith.constant 3 : index
    %c0_203 = arith.constant 0 : index
    %c0_204 = arith.constant 0 : index
    %79 = vector.load %arg2[%c0_199, %c1_200, %c2_201, %c3_202, %c0_203, %c0_204] : memref<1x3x4x4x4x4xf32, #tpu.memory_space<vmem>>, vector<1x1x1x1x4x4xf32>
    %80 = vector.shape_cast %79 : vector<1x1x1x1x4x4xf32> to vector<4x4xf32>
    %c0_205 = arith.constant 0 : index
    %c2_206 = arith.constant 2 : index
    %c2_207 = arith.constant 2 : index
    %c0_208 = arith.constant 0 : index
    %c0_209 = arith.constant 0 : index
    %c0_210 = arith.constant 0 : index
    %81 = vector.load %arg2[%c0_205, %c2_206, %c2_207, %c0_208, %c0_209, %c0_210] : memref<1x3x4x4x4x4xf32, #tpu.memory_space<vmem>>, vector<1x1x1x1x4x4xf32>
    %82 = vector.shape_cast %81 : vector<1x1x1x1x4x4xf32> to vector<4x4xf32>
    %c0_211 = arith.constant 0 : index
    %c2_212 = arith.constant 2 : index
    %c2_213 = arith.constant 2 : index
    %c1_214 = arith.constant 1 : index
    %c0_215 = arith.constant 0 : index
    %c0_216 = arith.constant 0 : index
    %83 = vector.load %arg2[%c0_211, %c2_212, %c2_213, %c1_214, %c0_215, %c0_216] : memref<1x3x4x4x4x4xf32, #tpu.memory_space<vmem>>, vector<1x1x1x1x4x4xf32>
    %84 = vector.shape_cast %83 : vector<1x1x1x1x4x4xf32> to vector<4x4xf32>
    %c0_217 = arith.constant 0 : index
    %c2_218 = arith.constant 2 : index
    %c2_219 = arith.constant 2 : index
    %c2_220 = arith.constant 2 : index
    %c0_221 = arith.constant 0 : index
    %c0_222 = arith.constant 0 : index
    %85 = vector.load %arg2[%c0_217, %c2_218, %c2_219, %c2_220, %c0_221, %c0_222] : memref<1x3x4x4x4x4xf32, #tpu.memory_space<vmem>>, vector<1x1x1x1x4x4xf32>
    %86 = vector.shape_cast %85 : vector<1x1x1x1x4x4xf32> to vector<4x4xf32>
    %c0_223 = arith.constant 0 : index
    %c2_224 = arith.constant 2 : index
    %c2_225 = arith.constant 2 : index
    %c3_226 = arith.constant 3 : index
    %c0_227 = arith.constant 0 : index
    %c0_228 = arith.constant 0 : index
    %87 = vector.load %arg2[%c0_223, %c2_224, %c2_225, %c3_226, %c0_227, %c0_228] : memref<1x3x4x4x4x4xf32, #tpu.memory_space<vmem>>, vector<1x1x1x1x4x4xf32>
    %88 = vector.shape_cast %87 : vector<1x1x1x1x4x4xf32> to vector<4x4xf32>
    %89 = tpu.concatenate %66, %68, %70, %72, %74, %76, %78, %80, %82, %84, %86, %88 in 1 : vector<4x4xf32>, vector<4x4xf32>, vector<4x4xf32>, vector<4x4xf32>, vector<4x4xf32>, vector<4x4xf32>, vector<4x4xf32>, vector<4x4xf32>, vector<4x4xf32>, vector<4x4xf32>, vector<4x4xf32>, vector<4x4xf32> -> vector<4x48xf32>
    %cst_229 = arith.constant dense<0.000000e+00> : vector<4x32xf32>
    %90 = tpu.matmul %89, %0, %cst_229 {dimension_numbers = #tpu.dot_dimension_numbers<[1], [0], [0], [1], [0, 0, 1, 1], [], []>} : vector<4x48xf32>, vector<48x32xf32>, vector<4x32xf32> -> vector<4x32xf32>
    %c2_230 = arith.constant 2 : index
    %c0_231 = arith.constant 0 : index
    %c0_232 = arith.constant 0 : index
    %91 = vector.load %arg4[%c2_230, %c0_231, %c0_232] : memref<4x4x32xf32, #tpu.memory_space<vmem>>, vector<1x4x32xf32>
    %92 = vector.shape_cast %91 : vector<1x4x32xf32> to vector<4x32xf32>
    %93 = arith.addf %90, %92 : vector<4x32xf32>
    %c0_233 = arith.constant 0 : index
    %c2_234 = arith.constant 2 : index
    %c0_235 = arith.constant 0 : index
    %c0_236 = arith.constant 0 : index
    %94 = vector.load %arg5[%c0_233, %c2_234, %c0_235, %c0_236] : memref<1x4x4x32xf32, #tpu.memory_space<vmem>>, vector<1x1x4x32xf32>
    %95 = vector.shape_cast %94 : vector<1x1x4x32xf32> to vector<4x32xf32>
    %96 = vector.shape_cast %93 : vector<4x32xf32> to vector<1x1x4x32xf32>
    tpu.vector_store %arg5[%c0_233, %c2_234, %c0_235, %c0_236], %96 {strides = array<i32>} : memref<1x4x4x32xf32, #tpu.memory_space<vmem>>, vector<1x1x4x32xf32>,
    %c0_237 = arith.constant 0 : index
    %c0_238 = arith.constant 0 : index
    %c3_239 = arith.constant 3 : index
    %c0_240 = arith.constant 0 : index
    %c0_241 = arith.constant 0 : index
    %c0_242 = arith.constant 0 : index
    %97 = vector.load %arg2[%c0_237, %c0_238, %c3_239, %c0_240, %c0_241, %c0_242] : memref<1x3x4x4x4x4xf32, #tpu.memory_space<vmem>>, vector<1x1x1x1x4x4xf32>
    %98 = vector.shape_cast %97 : vector<1x1x1x1x4x4xf32> to vector<4x4xf32>
    %c0_243 = arith.constant 0 : index
    %c0_244 = arith.constant 0 : index
    %c3_245 = arith.constant 3 : index
    %c1_246 = arith.constant 1 : index
    %c0_247 = arith.constant 0 : index
    %c0_248 = arith.constant 0 : index
    %99 = vector.load %arg2[%c0_243, %c0_244, %c3_245, %c1_246, %c0_247, %c0_248] : memref<1x3x4x4x4x4xf32, #tpu.memory_space<vmem>>, vector<1x1x1x1x4x4xf32>
    %100 = vector.shape_cast %99 : vector<1x1x1x1x4x4xf32> to vector<4x4xf32>
    %c0_249 = arith.constant 0 : index
    %c0_250 = arith.constant 0 : index
    %c3_251 = arith.constant 3 : index
    %c2_252 = arith.constant 2 : index
    %c0_253 = arith.constant 0 : index
    %c0_254 = arith.constant 0 : index
    %101 = vector.load %arg2[%c0_249, %c0_250, %c3_251, %c2_252, %c0_253, %c0_254] : memref<1x3x4x4x4x4xf32, #tpu.memory_space<vmem>>, vector<1x1x1x1x4x4xf32>
    %102 = vector.shape_cast %101 : vector<1x1x1x1x4x4xf32> to vector<4x4xf32>
    %c0_255 = arith.constant 0 : index
    %c0_256 = arith.constant 0 : index
    %c3_257 = arith.constant 3 : index
    %c3_258 = arith.constant 3 : index
    %c0_259 = arith.constant 0 : index
    %c0_260 = arith.constant 0 : index
    %103 = vector.load %arg2[%c0_255, %c0_256, %c3_257, %c3_258, %c0_259, %c0_260] : memref<1x3x4x4x4x4xf32, #tpu.memory_space<vmem>>, vector<1x1x1x1x4x4xf32>
    %104 = vector.shape_cast %103 : vector<1x1x1x1x4x4xf32> to vector<4x4xf32>
    %c0_261 = arith.constant 0 : index
    %c1_262 = arith.constant 1 : index
    %c3_263 = arith.constant 3 : index
    %c0_264 = arith.constant 0 : index
    %c0_265 = arith.constant 0 : index
    %c0_266 = arith.constant 0 : index
    %105 = vector.load %arg2[%c0_261, %c1_262, %c3_263, %c0_264, %c0_265, %c0_266] : memref<1x3x4x4x4x4xf32, #tpu.memory_space<vmem>>, vector<1x1x1x1x4x4xf32>
    %106 = vector.shape_cast %105 : vector<1x1x1x1x4x4xf32> to vector<4x4xf32>
    %c0_267 = arith.constant 0 : index
    %c1_268 = arith.constant 1 : index
    %c3_269 = arith.constant 3 : index
    %c1_270 = arith.constant 1 : index
    %c0_271 = arith.constant 0 : index
    %c0_272 = arith.constant 0 : index
    %107 = vector.load %arg2[%c0_267, %c1_268, %c3_269, %c1_270, %c0_271, %c0_272] : memref<1x3x4x4x4x4xf32, #tpu.memory_space<vmem>>, vector<1x1x1x1x4x4xf32>
    %108 = vector.shape_cast %107 : vector<1x1x1x1x4x4xf32> to vector<4x4xf32>
    %c0_273 = arith.constant 0 : index
    %c1_274 = arith.constant 1 : index
    %c3_275 = arith.constant 3 : index
    %c2_276 = arith.constant 2 : index
    %c0_277 = arith.constant 0 : index
    %c0_278 = arith.constant 0 : index
    %109 = vector.load %arg2[%c0_273, %c1_274, %c3_275, %c2_276, %c0_277, %c0_278] : memref<1x3x4x4x4x4xf32, #tpu.memory_space<vmem>>, vector<1x1x1x1x4x4xf32>
    %110 = vector.shape_cast %109 : vector<1x1x1x1x4x4xf32> to vector<4x4xf32>
    %c0_279 = arith.constant 0 : index
    %c1_280 = arith.constant 1 : index
    %c3_281 = arith.constant 3 : index
    %c3_282 = arith.constant 3 : index
    %c0_283 = arith.constant 0 : index
    %c0_284 = arith.constant 0 : index
    %111 = vector.load %arg2[%c0_279, %c1_280, %c3_281, %c3_282, %c0_283, %c0_284] : memref<1x3x4x4x4x4xf32, #tpu.memory_space<vmem>>, vector<1x1x1x1x4x4xf32>
    %112 = vector.shape_cast %111 : vector<1x1x1x1x4x4xf32> to vector<4x4xf32>
    %c0_285 = arith.constant 0 : index
    %c2_286 = arith.constant 2 : index
    %c3_287 = arith.constant 3 : index
    %c0_288 = arith.constant 0 : index
    %c0_289 = arith.constant 0 : index
    %c0_290 = arith.constant 0 : index
    %113 = vector.load %arg2[%c0_285, %c2_286, %c3_287, %c0_288, %c0_289, %c0_290] : memref<1x3x4x4x4x4xf32, #tpu.memory_space<vmem>>, vector<1x1x1x1x4x4xf32>
    %114 = vector.shape_cast %113 : vector<1x1x1x1x4x4xf32> to vector<4x4xf32>
    %c0_291 = arith.constant 0 : index
    %c2_292 = arith.constant 2 : index
    %c3_293 = arith.constant 3 : index
    %c1_294 = arith.constant 1 : index
    %c0_295 = arith.constant 0 : index
    %c0_296 = arith.constant 0 : index
    %115 = vector.load %arg2[%c0_291, %c2_292, %c3_293, %c1_294, %c0_295, %c0_296] : memref<1x3x4x4x4x4xf32, #tpu.memory_space<vmem>>, vector<1x1x1x1x4x4xf32>
    %116 = vector.shape_cast %115 : vector<1x1x1x1x4x4xf32> to vector<4x4xf32>
    %c0_297 = arith.constant 0 : index
    %c2_298 = arith.constant 2 : index
    %c3_299 = arith.constant 3 : index
    %c2_300 = arith.constant 2 : index
    %c0_301 = arith.constant 0 : index
    %c0_302 = arith.constant 0 : index
    %117 = vector.load %arg2[%c0_297, %c2_298, %c3_299, %c2_300, %c0_301, %c0_302] : memref<1x3x4x4x4x4xf32, #tpu.memory_space<vmem>>, vector<1x1x1x1x4x4xf32>
    %118 = vector.shape_cast %117 : vector<1x1x1x1x4x4xf32> to vector<4x4xf32>
    %c0_303 = arith.constant 0 : index
    %c2_304 = arith.constant 2 : index
    %c3_305 = arith.constant 3 : index
    %c3_306 = arith.constant 3 : index
    %c0_307 = arith.constant 0 : index
    %c0_308 = arith.constant 0 : index
    %119 = vector.load %arg2[%c0_303, %c2_304, %c3_305, %c3_306, %c0_307, %c0_308] : memref<1x3x4x4x4x4xf32, #tpu.memory_space<vmem>>, vector<1x1x1x1x4x4xf32>
    %120 = vector.shape_cast %119 : vector<1x1x1x1x4x4xf32> to vector<4x4xf32>
    %121 = tpu.concatenate %98, %100, %102, %104, %106, %108, %110, %112, %114, %116, %118, %120 in 1 : vector<4x4xf32>, vector<4x4xf32>, vector<4x4xf32>, vector<4x4xf32>, vector<4x4xf32>, vector<4x4xf32>, vector<4x4xf32>, vector<4x4xf32>, vector<4x4xf32>, vector<4x4xf32>, vector<4x4xf32>, vector<4x4xf32> -> vector<4x48xf32>
    %cst_309 = arith.constant dense<0.000000e+00> : vector<4x32xf32>
    %122 = tpu.matmul %121, %0, %cst_309 {dimension_numbers = #tpu.dot_dimension_numbers<[1], [0], [0], [1], [0, 0, 1, 1], [], []>} : vector<4x48xf32>, vector<48x32xf32>, vector<4x32xf32> -> vector<4x32xf32>
    %c3_310 = arith.constant 3 : index
    %c0_311 = arith.constant 0 : index
    %c0_312 = arith.constant 0 : index
    %123 = vector.load %arg4[%c3_310, %c0_311, %c0_312] : memref<4x4x32xf32, #tpu.memory_space<vmem>>, vector<1x4x32xf32>
    %124 = vector.shape_cast %123 : vector<1x4x32xf32> to vector<4x32xf32>
    %125 = arith.addf %122, %124 : vector<4x32xf32>
    %c0_313 = arith.constant 0 : index
    %c3_314 = arith.constant 3 : index
    %c0_315 = arith.constant 0 : index
    %c0_316 = arith.constant 0 : index
    %126 = vector.load %arg5[%c0_313, %c3_314, %c0_315, %c0_316] : memref<1x4x4x32xf32, #tpu.memory_space<vmem>>, vector<1x1x4x32xf32>
    %127 = vector.shape_cast %126 : vector<1x1x4x32xf32> to vector<4x32xf32>
    %128 = vector.shape_cast %125 : vector<4x32xf32> to vector<1x1x4x32xf32>
    tpu.vector_store %arg5[%c0_313, %c3_314, %c0_315, %c0_316], %128 {strides = array<i32>} : memref<1x4x4x32xf32, #tpu.memory_space<vmem>>, vector<1x1x4x32xf32>,
    return
  }
  func.func @transform_0(%arg0: i32, %arg1: i32) -> (i32, i32, i32, i32, i32, i32) {
    %c0_i32 = arith.constant 0 : i32
    %c0_i32_0 = arith.constant 0 : i32
    %c0_i32_1 = arith.constant 0 : i32
    %c0_i32_2 = arith.constant 0 : i32
    %c0_i32_3 = arith.constant 0 : i32
    return %arg1, %c0_i32, %arg0, %c0_i32_0, %c0_i32_1, %c0_i32_2 : i32, i32, i32, i32, i32, i32
  }
  func.func @transform_1(%arg0: i32, %arg1: i32) -> (i32, i32) {
    %c0_i32 = arith.constant 0 : i32
    %c0_i32_0 = arith.constant 0 : i32
    %c0_i32_1 = arith.constant 0 : i32
    return %c0_i32, %c0_i32_0 : i32, i32
  }
  func.func @transform_2(%arg0: i32, %arg1: i32) -> (i32, i32, i32) {
    %c0_i32 = arith.constant 0 : i32
    %c0_i32_0 = arith.constant 0 : i32
    %c0_i32_1 = arith.constant 0 : i32
    return %arg0, %c0_i32, %c0_i32_0 : i32, i32, i32
  }
  func.func @transform_3(%arg0: i32, %arg1: i32) -> (i32, i32, i32, i32) {
    %c0_i32 = arith.constant 0 : i32
    %c0_i32_0 = arith.constant 0 : i32
    %c0_i32_1 = arith.constant 0 : i32
    return %arg1, %arg0, %c0_i32, %c0_i32_0 : i32, i32, i32, i32
  }
}

</mosaic_0001>

<llo_original>
// kernel: tpu_custom_call.1
$region0: #{tpu_custom_call.1}
  #allocation0 [shape = 'u32[]', space=smem, size = 0x4, offset = 0x4, fixed_abs, tag = 'smem constant byte address 0x4 - core index']
  #allocation1 [shape = 'u32[144,128]{1,0:T(1,128)}', space=vmem, size = 0x12000, scoped, tag = 'internal scratch']
  %s0 = inlined_call_operand.hbm [shape: f32[2,3,4,4,4,4], index: 0, kind: input, shape index: {}]
  %s1 = inlined_call_operand.vmem [shape: f32[48,32], index: 1, kind: input, shape index: {}]
  %s2 = inlined_call_operand.vmem [shape: f32[4,4,32], index: 2, kind: input, shape index: {}]
  %s3 = inlined_call_operand.hbm [shape: f32[2,4,4,32], index: 3, kind: output, shape index: {}]
  %s4 = sld [smem:[#allocation0]]
  $region49: #{tpu_custom_call.1} parent=0
    _
  %s6 = ssub.s32 1, %s4
  %s7 = scalar_select 0, %s6, %s4
  $region1: #{tpu_custom_call.1} parent=0
    #allocation2 [shape = 'u8[196608]{0}', space=vmem, size = 0x30000, scoped, tag = 'input window, operand 0']
    #allocation3 [shape = 's32[2]{0}', space=sflag, size = 0x8, scoped, tag = 'scoped memory for tpu_custom_call.1']
    #allocation4 [shape = 's32[2]{0}', space=sflag, size = 0x8, scoped, tag = 'scoped memory for tpu_custom_call.1']
    #allocation5 [shape = 'u8[16384]{0}', space=vmem, size = 0x4000, scoped, tag = 'output window, operand 0']
    %8 = vsyncpa [#allocation3], 0
    %s9 = scalar_lea.sflag [#allocation3], 1
    %10 = vsyncpa %s9, 0
    %11 = vsyncpa [#allocation4], 0
    %s12 = scalar_lea.sflag [#allocation4], 1
    %13 = vsyncpa %s12, 0
    loop: start=0, step=1, limit=4
    $region2: #{tpu_custom_call.1} parent=1 // loop_pre_header
      _
    $region3: #{tpu_custom_call.1} parent=1 // loop_header
      %s15 = sphi 0, %s19
      %p16 = scmp.ge.s32.totalorder %s15, 4
      %s22 = sphi 0, %s34
      %s23 = sphi 0, %s30
      %s24 = sphi 0, %s22
      %s25 = sphi 0, %s23
      %s26 = sphi 0, %s24
      %s27 = sphi 0, %s25
      %s39 = sphi 0, %s41
      %s42 = sphi 0, %s39
      %s43 = sphi 0, %s42
      %s59 = sphi 0, %s43
      %s63 = sphi 0, %s63
      %s65 = sphi 0, %s63
      %s66 = sphi 0, %s65
      %s80 = sphi 0, %s66
      %s86 = sphi 0, %s88
      %s89 = sphi 0, %s86
      %s90 = sphi 0, %s89
      %s106 = sphi 0, %s90
      %s114 = sphi 0, %s116
      %s117 = sphi 0, %s114
      %s118 = sphi 0, %s117
      %s134 = sphi 0, %s118
    $region4: #{tpu_custom_call.1} parent=1 // loop_header_branch
      %18 = sbr.rel (%p16) target = $region8
    $region5: #{tpu_custom_call.1} parent=1 // loop_body
      %s20 = ssub.s32 %s15, 1
      %s21 = ssub.s32 %s15, 2
      %s28 = sadd.s32 1, %s23
      %p29 = scmp.ge.s32.totalorder %s28, 2
      %s30 = scalar_select %p29, 0, %s28
      %s31 = sadd.s32 1, %s22
      %s32 = scalar_select %p29, %s31, %s22
      %p33 = scmp.ge.s32.totalorder %s32, 1
      %s34 = scalar_select %p33, 0, %s32
      %s35 = ssub.s32 %s23, %s30
      %s36 = ssub.s32 %s22, %s34
      %s37 = sor.u32 %s35, %s36
      %p38 = scmp.eq.s32.totalorder %s37, 0
      %s40 = sadd.s32 %s39, 1
      %s41 = scalar_select %p38, %s39, %s40
      %p44 = pneg %p38
      %p45 = scmp.eq.s32.totalorder %s15, 1
      %p46 = por %p44, %p45
      %p47 = scmp.ne.s32.totalorder %s39, %s42
      %p48 = scmp.eq.s32.totalorder %s15, 0
      %p49 = por %p47, %p48
      %p50 = scmp.ne.s32.totalorder %s39, %s42
      %p51 = scmp.eq.s32.totalorder %s20, 1
      %p52 = por %p50, %p51
      %p53 = scmp.ne.s32.totalorder %s42, %s43
      %p54 = scmp.eq.s32.totalorder %s20, 0
      %p55 = por %p53, %p54
      %p56 = scmp.ne.s32.totalorder %s42, %s43
      %p57 = scmp.eq.s32.totalorder %s21, 1
      %p58 = por %p56, %p57
      %p60 = scmp.ne.s32.totalorder %s43, %s59
      %p61 = scmp.eq.s32.totalorder %s21, 0
      %p62 = por %p60, %p61
      %s64 = sadd.s32 %s63, 1
      %p67 = scmp.eq.s32.totalorder %s15, 1
      %p68 = scmp.ne.s32.totalorder %s63, %s65
      %p69 = scmp.eq.s32.totalorder %s15, 0
      %p70 = por %p68, %p69
      %p71 = scmp.ne.s32.totalorder %s63, %s65
      %p72 = scmp.eq.s32.totalorder %s20, 1
      %p73 = por %p71, %p72
      %p74 = scmp.ne.s32.totalorder %s65, %s66
      %p75 = scmp.eq.s32.totalorder %s20, 0
      %p76 = por %p74, %p75
      %p77 = scmp.ne.s32.totalorder %s65, %s66
      %p78 = scmp.eq.s32.totalorder %s21, 1
      %p79 = por %p77, %p78
      %p81 = scmp.ne.s32.totalorder %s66, %s80
      %p82 = scmp.eq.s32.totalorder %s21, 0
      %p83 = por %p81, %p82
      %s84 = ssub.s32 %s22, %s34
      %p85 = scmp.eq.s32.totalorder %s84, 0
      %s87 = sadd.s32 %s86, 1
      %s88 = scalar_select %p85, %s86, %s87
      %p91 = pneg %p85
      %p92 = scmp.eq.s32.totalorder %s15, 1
      %p93 = por %p91, %p92
      %p94 = scmp.ne.s32.totalorder %s86, %s89
      %p95 = scmp.eq.s32.totalorder %s15, 0
      %p96 = por %p94, %p95
      %p97 = scmp.ne.s32.totalorder %s86, %s89
      %p98 = scmp.eq.s32.totalorder %s20, 1
      %p99 = por %p97, %p98
      %p100 = scmp.ne.s32.totalorder %s89, %s90
      %p101 = scmp.eq.s32.totalorder %s20, 0
      %p102 = por %p100, %p101
      %p103 = scmp.ne.s32.totalorder %s89, %s90
      %p104 = scmp.eq.s32.totalorder %s21, 1
      %p105 = por %p103, %p104
      %p107 = scmp.ne.s32.totalorder %s90, %s106
      %p108 = scmp.eq.s32.totalorder %s21, 0
      %p109 = por %p107, %p108
      %s110 = ssub.s32 %s23, %s30
      %s111 = ssub.s32 %s22, %s34
      %s112 = sor.u32 %s110, %s111
      %p113 = scmp.eq.s32.totalorder %s112, 0
      %s115 = sadd.s32 %s114, 1
      %s116 = scalar_select %p113, %s114, %s115
      %p119 = pneg %p113
      %p120 = scmp.eq.s32.totalorder %s15, 1
      %p121 = por %p119, %p120
      %p122 = scmp.ne.s32.totalorder %s114, %s117
      %p123 = scmp.eq.s32.totalorder %s15, 0
      %p124 = por %p122, %p123
      %p125 = scmp.ne.s32.totalorder %s114, %s117
      %p126 = scmp.eq.s32.totalorder %s20, 1
      %p127 = por %p125, %p126
      %p128 = scmp.ne.s32.totalorder %s117, %s118
      %p129 = scmp.eq.s32.totalorder %s20, 0
      %p130 = por %p128, %p129
      %p131 = scmp.ne.s32.totalorder %s117, %s118
      %p132 = scmp.eq.s32.totalorder %s21, 1
      %p133 = por %p131, %p132
      %p135 = scmp.ne.s32.totalorder %s118, %s134
      %p136 = scmp.eq.s32.totalorder %s21, 0
      %p137 = por %p135, %p136
      %p138 = scmp.le.s32.totalorder 1, %s15
      %p139 = scmp.lt.s32.totalorder %s15, 3
      %p140 = pnand %p138, %p139
      %p141 = pneg %p140
      // Predicated region
      $region9: #{tpu_custom_call.1} parent=5 // pred_check
        _
      $region10: #{tpu_custom_call.1} parent=5 // pred_check_branch
        %143 = sbr.rel (%p140) target = $region12
      $region11: #{tpu_custom_call.1} parent=5 // pred_region
        %s144 = ssub.s32 %s15, 1
        // Predicated region
        $region13: #{tpu_custom_call.1} parent=11 // pred_check
          %p145 = pneg %p76
        $region14: #{tpu_custom_call.1} parent=11 // pred_check_branch
          %147 = sbr.rel (%p145) target = $region16
        $region15: #{tpu_custom_call.1} parent=11 // pred_region
          _
        $region16: #{tpu_custom_call.1} parent=11 // pred_fallthru
          _
        // Predicated region
        $region17: #{tpu_custom_call.1} parent=11 // pred_check
          %p148 = pneg %p102
        $region18: #{tpu_custom_call.1} parent=11 // pred_check_branch
          %150 = sbr.rel (%p148) target = $region20
        $region19: #{tpu_custom_call.1} parent=11 // pred_region
          %s151 = smul.u32 4, %s24
          %p152 = scmp.lt.s32.totalorder %s151, 3
          %s153 = scalar_select %p152, %s151, 3
          %s154 = smul.addr %s153, 4
          %s155 = scalar_lea.vmem %s2, %s154
          %s156 = smul.u32 4, %s24
        $region20: #{tpu_custom_call.1} parent=11 // pred_fallthru
          _
      $region12: #{tpu_custom_call.1} parent=5 // pred_fallthru
        _
      %p157 = scmp.lt.s32.totalorder %s15, 2
      // Predicated region
      $region21: #{tpu_custom_call.1} parent=5 // pred_check
        %p158 = pneg %p157
      $region22: #{tpu_custom_call.1} parent=5 // pred_check_branch
        %160 = sbr.rel (%p158) target = $region24
      $region23: #{tpu_custom_call.1} parent=5 // pred_region
        // Predicated region
        $region25: #{tpu_custom_call.1} parent=23 // pred_check
          %p161 = pneg %p49
        $region26: #{tpu_custom_call.1} parent=23 // pred_check_branch
          %163 = sbr.rel (%p161) target = $region28
        $region27: #{tpu_custom_call.1} parent=23 // pred_region
          %s164 = sand.u32 %s39, 1
          %s165 = scalar_lea.sflag [#allocation3], %s164
          %s166 = sand.u32 %s39, 1
          %s167 = smul.addr %s166, 192
          %s168 = scalar_lea.vmem [#allocation2], %s167
          %s169 = smul.u32 4, %s22
          %s171 = ssub.s32 3072, 3072
          %172 = vsyncadd %s165, %s171
          %s173 = smul.addr %s169, 4
          %s174 = smul.addr %s23, 48
          %s175 = sadd.s32 %s173, %s174
          %s176 = smul.addr %s175, 64
          %s177 = scalar_lea.hbm %s0, %s176
          %s178 = sshll.u32 %s168, 4
          %s179 = int_to_ptr.vmem [resolvable:$true] %s178
          %184 = dma.hbm_to_vmem [thread:$0]  %s177, 3072, %s179, %s165, 64, 64, 4
        $region28: #{tpu_custom_call.1} parent=23 // pred_fallthru
          _
      $region24: #{tpu_custom_call.1} parent=5 // pred_fallthru
        _
      %p185 = scmp.le.s32.totalorder 1, %s15
      %p186 = scmp.lt.s32.totalorder %s15, 3
      %p187 = pnand %p185, %p186
      %p188 = pneg %p187
      // Predicated region
      $region29: #{tpu_custom_call.1} parent=5 // pred_check
        _
      $region30: #{tpu_custom_call.1} parent=5 // pred_check_branch
        %190 = sbr.rel (%p187) target = $region32
      $region31: #{tpu_custom_call.1} parent=5 // pred_region
        %s191 = ssub.s32 %s15, 1
        %s192 = sand.u32 %s42, 1
        %s193 = scalar_lea.sflag [#allocation3], %s192
        %s194 = sand.u32 %s42, 1
        %s195 = smul.addr %s194, 192
        %s196 = scalar_lea.vmem [#allocation2], %s195
        // Predicated region
        $region33: #{tpu_custom_call.1} parent=31 // pred_check
          %p197 = pneg %p55
        $region34: #{tpu_custom_call.1} parent=31 // pred_check_branch
          %199 = sbr.rel (%p197) target = $region36
        $region35: #{tpu_custom_call.1} parent=31 // pred_region
          %200 = dma.done %s193, 3072
        $region36: #{tpu_custom_call.1} parent=31 // pred_fallthru
          _
        %s201 = sand.u32 %s42, 1
        %s202 = scalar_lea.sflag [#allocation3], %s201
        %s203 = sand.u32 %s42, 1
        %s204 = smul.addr %s203, 192
        %s205 = scalar_lea.vmem [#allocation2], %s204
        %p206 = pneg %p55
        %p207 = pneg %p52
        %p208 = pneg %p76
        %p209 = pneg %p73
        %s210 = smul.u32 4, %s24
        %p211 = scmp.lt.s32.totalorder %s210, 3
        %s212 = scalar_select %p211, %s210, 3
        %s213 = smul.addr %s212, 4
        %s214 = scalar_lea.vmem %s2, %s213
        %p215 = pneg %p102
        %p216 = pneg %p99
        %p217 = pneg %p130
        %p218 = pneg %p127
        %s219 = sand.u32 %s117, 1
        %s220 = scalar_lea.sflag [#allocation4], %s219
        %s221 = sand.u32 %s117, 1
        %s222 = smul.addr %s221, 16
        %s223 = scalar_lea.vmem [#allocation5], %s222
        %s224 = smul.u32 4, %s24
        %s225 = smul.u32 4, %s24
        %p226 = scmp.lt.s32.totalorder %s225, 3
        %s227 = scalar_select %p226, %s225, 3
        %s228 = smul.addr %s227, 4
        %s229 = scalar_lea.vmem %s2, %s228
        %s230 = smul.u32 4, %s24
        %s231 = smul.u32 4, %s24
        %v232 = vld [vmem:[%s1] sm:$0xff]
        %v233 = vld [vmem:[%s1 + $0x8] sm:$0xff]
        %v234 = vld [vmem:[%s1 + $0x10] sm:$0xff]
        %v235 = vld [vmem:[%s1 + $0x18] sm:$0xff]
        %v236 = vld [vmem:[%s1 + $0x20] sm:$0xff]
        %v237 = vld [vmem:[%s1 + $0x28] sm:$0xff]
        %v238 = vld [vmem:[%s196] sm:$0xf]
        %s239 = scalar_lea.vmem %s196, 4 [#allocation2]
        %v240 = vld [vmem:[%s239] sm:$0xf]
        %s241 = scalar_lea.vmem %s196, 8 [#allocation2]
        %v242 = vld [vmem:[%s241] sm:$0xf]
        %s243 = scalar_lea.vmem %s196, 12 [#allocation2]
        %v244 = vld [vmem:[%s243] sm:$0xf]
        %s245 = scalar_lea.vmem %s196, 64 [#allocation2]
        %v246 = vld [vmem:[%s245] sm:$0xf]
        %s247 = scalar_lea.vmem %s196, 68 [#allocation2]
        %v248 = vld [vmem:[%s247] sm:$0xf]
        %s249 = scalar_lea.vmem %s196, 72 [#allocation2]
        %v250 = vld [vmem:[%s249] sm:$0xf]
        %s251 = scalar_lea.vmem %s196, 76 [#allocation2]
        %v252 = vld [vmem:[%s251] sm:$0xf]
        %s253 = scalar_lea.vmem %s196, 128 [#allocation2]
        %v254 = vld [vmem:[%s253] sm:$0xf]
        %s255 = scalar_lea.vmem %s196, 132 [#allocation2]
        %v256 = vld [vmem:[%s255] sm:$0xf]
        %s257 = scalar_lea.vmem %s196, 136 [#allocation2]
        %v258 = vld [vmem:[%s257] sm:$0xf]
        %s259 = scalar_lea.vmem %s196, 140 [#allocation2]
        %v260 = vld [vmem:[%s259] sm:$0xf]
        %262 = vrot.lane.b32.xlu0 %v240, 4
        %v263 = vpop.permute.xlu0 %262
        %266 = vrot.lane.b32.xlu0 %v242, 8
        %v267 = vpop.permute.xlu0 %266
        %270 = vrot.lane.b32.xlu0 %v244, 12
        %v271 = vpop.permute.xlu0 %270
        %274 = vrot.lane.b32.xlu0 %v246, 16
        %v275 = vpop.permute.xlu0 %274
        %278 = vrot.lane.b32.xlu0 %v248, 20
        %v279 = vpop.permute.xlu0 %278
        %282 = vrot.lane.b32.xlu0 %v250, 24
        %v283 = vpop.permute.xlu0 %282
        %286 = vrot.lane.b32.xlu0 %v252, 28
        %v287 = vpop.permute.xlu0 %286
        %290 = vrot.lane.b32.xlu0 %v254, 32
        %v291 = vpop.permute.xlu0 %290
        %294 = vrot.lane.b32.xlu0 %v256, 36
        %v295 = vpop.permute.xlu0 %294
        %298 = vrot.lane.b32.xlu0 %v258, 40
        %v299 = vpop.permute.xlu0 %298
        %302 = vrot.lane.b32.xlu0 %v260, 44
        %v303 = vpop.permute.xlu0 %302
        %vm305 = vcmask 31744
        %v306 = vsel %vm305, %v238, %v263
        %vm307 = vcmask 64512
        %v308 = vsel %vm307, %v306, %v267
        %vm309 = vcmask 97280
        %v310 = vsel %vm309, %v308, %v271
        %vm311 = vcmask 130048
        %v312 = vsel %vm311, %v310, %v275
        %vm313 = vcmask 162816
        %v314 = vsel %vm313, %v312, %v279
        %vm315 = vcmask 195584
        %v316 = vsel %vm315, %v314, %v283
        %vm317 = vcmask 228352
        %v318 = vsel %vm317, %v316, %v287
        %vm319 = vcmask 261120
        %v320 = vsel %vm319, %v318, %v291
        %vm321 = vcmask 293888
        %v322 = vsel %vm321, %v320, %v295
        %vm323 = vcmask 326656
        %v324 = vsel %vm323, %v322, %v299
        %vm325 = vcmask 359424
        %v326 = vsel %vm325, %v324, %v303
        %v327 = vld [vmem:[%s229] sm:$0xf]
        %vm328 = vcmask 392192
        %v330 = vsel %vm328, %v326, 0
        %332 = vmatprep.subr.mxu0 0.0
        %333 = vmatpush1.msra.mxu0 0.0
        %334 = vmatprep.subr.mxu0 0.0
        %335 = vmatpush1.msra.mxu0 0.0
        %336 = vmatprep.subr.mxu0 0.0
        %337 = vmatpush1.msra.mxu0 0.0
        %338 = vmatprep.subr.mxu0 0.0
        %339 = vmatpush1.msra.mxu0 0.0
        %340 = vmatprep.subr.mxu0 0.0
        %341 = vmatpush1.msra.mxu0 0.0
        %342 = vmatprep.subr.mxu0 0.0
        %343 = vmatpush1.msra.mxu0 0.0
        %344 = vmatprep.subr.mxu0 0.0
        %345 = vmatpush1.msra.mxu0 0.0
        %346 = vmatprep.subr.mxu0 0.0
        %347 = vmatpush1.msra.mxu0 0.0
        %348 = vmatprep.subr.mxu0 0.0
        %349 = vmatpush1.msra.mxu0 0.0
        %350 = vmatprep.subr.mxu0 0.0
        %351 = vmatpush1.msra.mxu0 0.0
        %352 = vmatprep.subr.mxu0 0.0
        %353 = vmatpush1.msra.mxu0 %v237
        %354 = vmatprep.subr.mxu0 0.0
        %355 = vmatpush1.msra.mxu0 %v236
        %356 = vmatprep.subr.mxu0 0.0
        %357 = vmatpush1.msra.mxu0 %v235
        %358 = vmatprep.subr.mxu0 0.0
        %359 = vmatpush1.msra.mxu0 %v234
        %360 = vmatprep.subr.mxu0 0.0
        %361 = vmatpush1.msra.mxu0 %v233
        %362 = vmatprep.subr.mxu0 0.0
        %363 = vmatpush1.msra.mxu0 %v232
        %364 = vmatprep.subr.mxu0 0.0
        %365 = vmatpush2.msra.mxu0 0.0
        %366 = vmatprep.subr.mxu0 0.0
        %367 = vmatpush2.msra.mxu0 0.0
        %368 = vmatprep.subr.mxu0 0.0
        %369 = vmatpush2.msra.mxu0 0.0
        %370 = vmatprep.subr.mxu0 0.0
        %371 = vmatpush2.msra.mxu0 0.0
        %372 = vmatprep.subr.mxu0 0.0
        %373 = vmatpush2.msra.mxu0 0.0
        %374 = vmatprep.subr.mxu0 0.0
        %375 = vmatpush2.msra.mxu0 0.0
        %376 = vmatprep.subr.mxu0 0.0
        %377 = vmatpush2.msra.mxu0 0.0
        %378 = vmatprep.subr.mxu0 0.0
        %379 = vmatpush2.msra.mxu0 0.0
        %380 = vmatprep.subr.mxu0 0.0
        %381 = vmatpush2.msra.mxu0 0.0
        %382 = vmatprep.subr.mxu0 0.0
        %383 = vmatpush2.msra.mxu0 0.0
        %384 = vmatprep.subr.mxu0 0.0
        %385 = vmatpush2.msra.mxu0 0.0
        %386 = vmatprep.subr.mxu0 0.0
        %387 = vmatpush2.msra.mxu0 0.0
        %388 = vmatprep.subr.mxu0 0.0
        %389 = vmatpush2.msra.mxu0 0.0
        %390 = vmatprep.subr.mxu0 0.0
        %391 = vmatpush2.msra.mxu0 0.0
        %392 = vmatprep.subr.mxu0 0.0
        %393 = vmatpush2.msra.mxu0 0.0
        %394 = vmatprep.subr.mxu0 0.0
        %395 = vmatpush2.msra.mxu0 0.0
        %396 = vmatprep.mubr.f32.mxu0 0.0
        %397 = vmatmul.mubr.f32.gmra.mxu0 %v330
        %v398 = vpop.f32.mrf.mxu0
        %v399 = vadd.f32 %v327, %v398
        %v400 = vpop.f32.mrf.mxu0
        %401 = vdwg.mxu0
        %vm402 = vcmask 257024
        %403 = vst.msk [vmem:[%s223] sm:$0xf] %vm402, %v399
        %s404 = scalar_lea.vmem %s196, 16 [#allocation2]
        %v405 = vld [vmem:[%s404] sm:$0xf]
        %s406 = scalar_lea.vmem %s196, 20 [#allocation2]
        %v407 = vld [vmem:[%s406] sm:$0xf]
        %s408 = scalar_lea.vmem %s196, 24 [#allocation2]
        %v409 = vld [vmem:[%s408] sm:$0xf]
        %s410 = scalar_lea.vmem %s196, 28 [#allocation2]
        %v411 = vld [vmem:[%s410] sm:$0xf]
        %s412 = scalar_lea.vmem %s196, 80 [#allocation2]
        %v413 = vld [vmem:[%s412] sm:$0xf]
        %s414 = scalar_lea.vmem %s196, 84 [#allocation2]
        %v415 = vld [vmem:[%s414] sm:$0xf]
        %s416 = scalar_lea.vmem %s196, 88 [#allocation2]
        %v417 = vld [vmem:[%s416] sm:$0xf]
        %s418 = scalar_lea.vmem %s196, 92 [#allocation2]
        %v419 = vld [vmem:[%s418] sm:$0xf]
        %s420 = scalar_lea.vmem %s196, 144 [#allocation2]
        %v421 = vld [vmem:[%s420] sm:$0xf]
        %s422 = scalar_lea.vmem %s196, 148 [#allocation2]
        %v423 = vld [vmem:[%s422] sm:$0xf]
        %s424 = scalar_lea.vmem %s196, 152 [#allocation2]
        %v425 = vld [vmem:[%s424] sm:$0xf]
        %s426 = scalar_lea.vmem %s196, 156 [#allocation2]
        %v427 = vld [vmem:[%s426] sm:$0xf]
        %429 = vrot.lane.b32.xlu0 %v407, 4
        %v430 = vpop.permute.xlu0 %429
        %433 = vrot.lane.b32.xlu0 %v409, 8
        %v434 = vpop.permute.xlu0 %433
        %437 = vrot.lane.b32.xlu0 %v411, 12
        %v438 = vpop.permute.xlu0 %437
        %441 = vrot.lane.b32.xlu0 %v413, 16
        %v442 = vpop.permute.xlu0 %441
        %445 = vrot.lane.b32.xlu0 %v415, 20
        %v446 = vpop.permute.xlu0 %445
        %449 = vrot.lane.b32.xlu0 %v417, 24
        %v450 = vpop.permute.xlu0 %449
        %453 = vrot.lane.b32.xlu0 %v419, 28
        %v454 = vpop.permute.xlu0 %453
        %457 = vrot.lane.b32.xlu0 %v421, 32
        %v458 = vpop.permute.xlu0 %457
        %461 = vrot.lane.b32.xlu0 %v423, 36
        %v462 = vpop.permute.xlu0 %461
        %465 = vrot.lane.b32.xlu0 %v425, 40
        %v466 = vpop.permute.xlu0 %465
        %469 = vrot.lane.b32.xlu0 %v427, 44
        %v470 = vpop.permute.xlu0 %469
        %v472 = vsel %vm305, %v405, %v430
        %v473 = vsel %vm307, %v472, %v434
        %v474 = vsel %vm309, %v473, %v438
        %v475 = vsel %vm311, %v474, %v442
        %v476 = vsel %vm313, %v475, %v446
        %v477 = vsel %vm315, %v476, %v450
        %v478 = vsel %vm317, %v477, %v454
        %v479 = vsel %vm319, %v478, %v458
        %v480 = vsel %vm321, %v479, %v462
        %v481 = vsel %vm323, %v480, %v466
        %v482 = vsel %vm325, %v481, %v470
        %s483 = scalar_lea.vmem %s229, 4
        %v484 = vld [vmem:[%s483] sm:$0xf]
        %v486 = vsel %vm328, %v482, 0
        %488 = vmatprep.subr.mxu0 0.0
        %489 = vmatpush1.msra.mxu0 0.0
        %490 = vmatprep.subr.mxu0 0.0
        %491 = vmatpush1.msra.mxu0 0.0
        %492 = vmatprep.subr.mxu0 0.0
        %493 = vmatpush1.msra.mxu0 0.0
        %494 = vmatprep.subr.mxu0 0.0
        %495 = vmatpush1.msra.mxu0 0.0
        %496 = vmatprep.subr.mxu0 0.0
        %497 = vmatpush1.msra.mxu0 0.0
        %498 = vmatprep.subr.mxu0 0.0
        %499 = vmatpush1.msra.mxu0 0.0
        %500 = vmatprep.subr.mxu0 0.0
        %501 = vmatpush1.msra.mxu0 0.0
        %502 = vmatprep.subr.mxu0 0.0
        %503 = vmatpush1.msra.mxu0 0.0
        %504 = vmatprep.subr.mxu0 0.0
        %505 = vmatpush1.msra.mxu0 0.0
        %506 = vmatprep.subr.mxu0 0.0
        %507 = vmatpush1.msra.mxu0 0.0
        %508 = vmatprep.subr.mxu0 0.0
        %509 = vmatpush1.msra.mxu0 %v237
        %510 = vmatprep.subr.mxu0 0.0
        %511 = vmatpush1.msra.mxu0 %v236
        %512 = vmatprep.subr.mxu0 0.0
        %513 = vmatpush1.msra.mxu0 %v235
        %514 = vmatprep.subr.mxu0 0.0
        %515 = vmatpush1.msra.mxu0 %v234
        %516 = vmatprep.subr.mxu0 0.0
        %517 = vmatpush1.msra.mxu0 %v233
        %518 = vmatprep.subr.mxu0 0.0
        %519 = vmatpush1.msra.mxu0 %v232
        %520 = vmatprep.subr.mxu0 0.0
        %521 = vmatpush2.msra.mxu0 0.0
        %522 = vmatprep.subr.mxu0 0.0
        %523 = vmatpush2.msra.mxu0 0.0
        %524 = vmatprep.subr.mxu0 0.0
        %525 = vmatpush2.msra.mxu0 0.0
        %526 = vmatprep.subr.mxu0 0.0
        %527 = vmatpush2.msra.mxu0 0.0
        %528 = vmatprep.subr.mxu0 0.0
        %529 = vmatpush2.msra.mxu0 0.0
        %530 = vmatprep.subr.mxu0 0.0
        %531 = vmatpush2.msra.mxu0 0.0
        %532 = vmatprep.subr.mxu0 0.0
        %533 = vmatpush2.msra.mxu0 0.0
        %534 = vmatprep.subr.mxu0 0.0
        %535 = vmatpush2.msra.mxu0 0.0
        %536 = vmatprep.subr.mxu0 0.0
        %537 = vmatpush2.msra.mxu0 0.0
        %538 = vmatprep.subr.mxu0 0.0
        %539 = vmatpush2.msra.mxu0 0.0
        %540 = vmatprep.subr.mxu0 0.0
        %541 = vmatpush2.msra.mxu0 0.0
        %542 = vmatprep.subr.mxu0 0.0
        %543 = vmatpush2.msra.mxu0 0.0
        %544 = vmatprep.subr.mxu0 0.0
        %545 = vmatpush2.msra.mxu0 0.0
        %546 = vmatprep.subr.mxu0 0.0
        %547 = vmatpush2.msra.mxu0 0.0
        %548 = vmatprep.subr.mxu0 0.0
        %549 = vmatpush2.msra.mxu0 0.0
        %550 = vmatprep.subr.mxu0 0.0
        %551 = vmatpush2.msra.mxu0 0.0
        %552 = vmatprep.mubr.f32.mxu0 0.0
        %553 = vmatmul.mubr.f32.gmra.mxu0 %v486
        %v554 = vpop.f32.mrf.mxu0
        %v555 = vadd.f32 %v484, %v554
        %v556 = vpop.f32.mrf.mxu0
        %557 = vdwg.mxu0
        %s558 = scalar_lea.vmem %s223, 4 [#allocation5]
        %559 = vst.msk [vmem:[%s558] sm:$0xf] %vm402, %v555
        %s560 = scalar_lea.vmem %s196, 32 [#allocation2]
        %v561 = vld [vmem:[%s560] sm:$0xf]
        %s562 = scalar_lea.vmem %s196, 36 [#allocation2]
        %v563 = vld [vmem:[%s562] sm:$0xf]
        %s564 = scalar_lea.vmem %s196, 40 [#allocation2]
        %v565 = vld [vmem:[%s564] sm:$0xf]
        %s566 = scalar_lea.vmem %s196, 44 [#allocation2]
        %v567 = vld [vmem:[%s566] sm:$0xf]
        %s568 = scalar_lea.vmem %s196, 96 [#allocation2]
        %v569 = vld [vmem:[%s568] sm:$0xf]
        %s570 = scalar_lea.vmem %s196, 100 [#allocation2]
        %v571 = vld [vmem:[%s570] sm:$0xf]
        %s572 = scalar_lea.vmem %s196, 104 [#allocation2]
        %v573 = vld [vmem:[%s572] sm:$0xf]
        %s574 = scalar_lea.vmem %s196, 108 [#allocation2]
        %v575 = vld [vmem:[%s574] sm:$0xf]
        %s576 = scalar_lea.vmem %s196, 160 [#allocation2]
        %v577 = vld [vmem:[%s576] sm:$0xf]
        %s578 = scalar_lea.vmem %s196, 164 [#allocation2]
        %v579 = vld [vmem:[%s578] sm:$0xf]
        %s580 = scalar_lea.vmem %s196, 168 [#allocation2]
        %v581 = vld [vmem:[%s580] sm:$0xf]
        %s582 = scalar_lea.vmem %s196, 172 [#allocation2]
        %v583 = vld [vmem:[%s582] sm:$0xf]
        %585 = vrot.lane.b32.xlu0 %v563, 4
        %v586 = vpop.permute.xlu0 %585
        %589 = vrot.lane.b32.xlu0 %v565, 8
        %v590 = vpop.permute.xlu0 %589
        %593 = vrot.lane.b32.xlu0 %v567, 12
        %v594 = vpop.permute.xlu0 %593
        %597 = vrot.lane.b32.xlu0 %v569, 16
        %v598 = vpop.permute.xlu0 %597
        %601 = vrot.lane.b32.xlu0 %v571, 20
        %v602 = vpop.permute.xlu0 %601
        %605 = vrot.lane.b32.xlu0 %v573, 24
        %v606 = vpop.permute.xlu0 %605
        %609 = vrot.lane.b32.xlu0 %v575, 28
        %v610 = vpop.permute.xlu0 %609
        %613 = vrot.lane.b32.xlu0 %v577, 32
        %v614 = vpop.permute.xlu0 %613
        %617 = vrot.lane.b32.xlu0 %v579, 36
        %v618 = vpop.permute.xlu0 %617
        %621 = vrot.lane.b32.xlu0 %v581, 40
        %v622 = vpop.permute.xlu0 %621
        %625 = vrot.lane.b32.xlu0 %v583, 44
        %v626 = vpop.permute.xlu0 %625
        %v628 = vsel %vm305, %v561, %v586
        %v629 = vsel %vm307, %v628, %v590
        %v630 = vsel %vm309, %v629, %v594
        %v631 = vsel %vm311, %v630, %v598
        %v632 = vsel %vm313, %v631, %v602
        %v633 = vsel %vm315, %v632, %v606
        %v634 = vsel %vm317, %v633, %v610
        %v635 = vsel %vm319, %v634, %v614
        %v636 = vsel %vm321, %v635, %v618
        %v637 = vsel %vm323, %v636, %v622
        %v638 = vsel %vm325, %v637, %v626
        %s639 = scalar_lea.vmem %s229, 8
        %v640 = vld [vmem:[%s639] sm:$0xf]
        %v642 = vsel %vm328, %v638, 0
        %644 = vmatprep.subr.mxu0 0.0
        %645 = vmatpush1.msra.mxu0 0.0
        %646 = vmatprep.subr.mxu0 0.0
        %647 = vmatpush1.msra.mxu0 0.0
        %648 = vmatprep.subr.mxu0 0.0
        %649 = vmatpush1.msra.mxu0 0.0
        %650 = vmatprep.subr.mxu0 0.0
        %651 = vmatpush1.msra.mxu0 0.0
        %652 = vmatprep.subr.mxu0 0.0
        %653 = vmatpush1.msra.mxu0 0.0
        %654 = vmatprep.subr.mxu0 0.0
        %655 = vmatpush1.msra.mxu0 0.0
        %656 = vmatprep.subr.mxu0 0.0
        %657 = vmatpush1.msra.mxu0 0.0
        %658 = vmatprep.subr.mxu0 0.0
        %659 = vmatpush1.msra.mxu0 0.0
        %660 = vmatprep.subr.mxu0 0.0
        %661 = vmatpush1.msra.mxu0 0.0
        %662 = vmatprep.subr.mxu0 0.0
        %663 = vmatpush1.msra.mxu0 0.0
        %664 = vmatprep.subr.mxu0 0.0
        %665 = vmatpush1.msra.mxu0 %v237
        %666 = vmatprep.subr.mxu0 0.0
        %667 = vmatpush1.msra.mxu0 %v236
        %668 = vmatprep.subr.mxu0 0.0
        %669 = vmatpush1.msra.mxu0 %v235
        %670 = vmatprep.subr.mxu0 0.0
        %671 = vmatpush1.msra.mxu0 %v234
        %672 = vmatprep.subr.mxu0 0.0
        %673 = vmatpush1.msra.mxu0 %v233
        %674 = vmatprep.subr.mxu0 0.0
        %675 = vmatpush1.msra.mxu0 %v232
        %676 = vmatprep.subr.mxu0 0.0
        %677 = vmatpush2.msra.mxu0 0.0
        %678 = vmatprep.subr.mxu0 0.0
        %679 = vmatpush2.msra.mxu0 0.0
        %680 = vmatprep.subr.mxu0 0.0
        %681 = vmatpush2.msra.mxu0 0.0
        %682 = vmatprep.subr.mxu0 0.0
        %683 = vmatpush2.msra.mxu0 0.0
        %684 = vmatprep.subr.mxu0 0.0
        %685 = vmatpush2.msra.mxu0 0.0
        %686 = vmatprep.subr.mxu0 0.0
        %687 = vmatpush2.msra.mxu0 0.0
        %688 = vmatprep.subr.mxu0 0.0
        %689 = vmatpush2.msra.mxu0 0.0
        %690 = vmatprep.subr.mxu0 0.0
        %691 = vmatpush2.msra.mxu0 0.0
        %692 = vmatprep.subr.mxu0 0.0
        %693 = vmatpush2.msra.mxu0 0.0
        %694 = vmatprep.subr.mxu0 0.0
        %695 = vmatpush2.msra.mxu0 0.0
        %696 = vmatprep.subr.mxu0 0.0
        %697 = vmatpush2.msra.mxu0 0.0
        %698 = vmatprep.subr.mxu0 0.0
        %699 = vmatpush2.msra.mxu0 0.0
        %700 = vmatprep.subr.mxu0 0.0
        %701 = vmatpush2.msra.mxu0 0.0
        %702 = vmatprep.subr.mxu0 0.0
        %703 = vmatpush2.msra.mxu0 0.0
        %704 = vmatprep.subr.mxu0 0.0
        %705 = vmatpush2.msra.mxu0 0.0
        %706 = vmatprep.subr.mxu0 0.0
        %707 = vmatpush2.msra.mxu0 0.0
        %708 = vmatprep.mubr.f32.mxu0 0.0
        %709 = vmatmul.mubr.f32.gmra.mxu0 %v642
        %v710 = vpop.f32.mrf.mxu0
        %v711 = vadd.f32 %v640, %v710
        %v712 = vpop.f32.mrf.mxu0
        %713 = vdwg.mxu0
        %s714 = scalar_lea.vmem %s223, 8 [#allocation5]
        %715 = vst.msk [vmem:[%s714] sm:$0xf] %vm402, %v711
        %s716 = scalar_lea.vmem %s196, 48 [#allocation2]
        %v717 = vld [vmem:[%s716] sm:$0xf]
        %s718 = scalar_lea.vmem %s196, 52 [#allocation2]
        %v719 = vld [vmem:[%s718] sm:$0xf]
        %s720 = scalar_lea.vmem %s196, 56 [#allocation2]
        %v721 = vld [vmem:[%s720] sm:$0xf]
        %s722 = scalar_lea.vmem %s196, 60 [#allocation2]
        %v723 = vld [vmem:[%s722] sm:$0xf]
        %s724 = scalar_lea.vmem %s196, 112 [#allocation2]
        %v725 = vld [vmem:[%s724] sm:$0xf]
        %s726 = scalar_lea.vmem %s196, 116 [#allocation2]
        %v727 = vld [vmem:[%s726] sm:$0xf]
        %s728 = scalar_lea.vmem %s196, 120 [#allocation2]
        %v729 = vld [vmem:[%s728] sm:$0xf]
        %s730 = scalar_lea.vmem %s196, 124 [#allocation2]
        %v731 = vld [vmem:[%s730] sm:$0xf]
        %s732 = scalar_lea.vmem %s196, 176 [#allocation2]
        %v733 = vld [vmem:[%s732] sm:$0xf]
        %s734 = scalar_lea.vmem %s196, 180 [#allocation2]
        %v735 = vld [vmem:[%s734] sm:$0xf]
        %s736 = scalar_lea.vmem %s196, 184 [#allocation2]
        %v737 = vld [vmem:[%s736] sm:$0xf]
        %s738 = scalar_lea.vmem %s196, 188 [#allocation2]
        %v739 = vld [vmem:[%s738] sm:$0xf]
        %741 = vrot.lane.b32.xlu0 %v719, 4
        %v742 = vpop.permute.xlu0 %741
        %745 = vrot.lane.b32.xlu0 %v721, 8
        %v746 = vpop.permute.xlu0 %745
        %749 = vrot.lane.b32.xlu0 %v723, 12
        %v750 = vpop.permute.xlu0 %749
        %753 = vrot.lane.b32.xlu0 %v725, 16
        %v754 = vpop.permute.xlu0 %753
        %757 = vrot.lane.b32.xlu0 %v727, 20
        %v758 = vpop.permute.xlu0 %757
        %761 = vrot.lane.b32.xlu0 %v729, 24
        %v762 = vpop.permute.xlu0 %761
        %765 = vrot.lane.b32.xlu0 %v731, 28
        %v766 = vpop.permute.xlu0 %765
        %769 = vrot.lane.b32.xlu0 %v733, 32
        %v770 = vpop.permute.xlu0 %769
        %773 = vrot.lane.b32.xlu0 %v735, 36
        %v774 = vpop.permute.xlu0 %773
        %777 = vrot.lane.b32.xlu0 %v737, 40
        %v778 = vpop.permute.xlu0 %777
        %781 = vrot.lane.b32.xlu0 %v739, 44
        %v782 = vpop.permute.xlu0 %781
        %v784 = vsel %vm305, %v717, %v742
        %v785 = vsel %vm307, %v784, %v746
        %v786 = vsel %vm309, %v785, %v750
        %v787 = vsel %vm311, %v786, %v754
        %v788 = vsel %vm313, %v787, %v758
        %v789 = vsel %vm315, %v788, %v762
        %v790 = vsel %vm317, %v789, %v766
        %v791 = vsel %vm319, %v790, %v770
        %v792 = vsel %vm321, %v791, %v774
        %v793 = vsel %vm323, %v792, %v778
        %v794 = vsel %vm325, %v793, %v782
        %s795 = scalar_lea.vmem %s229, 12
        %v796 = vld [vmem:[%s795] sm:$0xf]
        %v798 = vsel %vm328, %v794, 0
        %800 = vmatprep.subr.mxu0 0.0
        %801 = vmatpush1.msra.mxu0 0.0
        %802 = vmatprep.subr.mxu0 0.0
        %803 = vmatpush1.msra.mxu0 0.0
        %804 = vmatprep.subr.mxu0 0.0
        %805 = vmatpush1.msra.mxu0 0.0
        %806 = vmatprep.subr.mxu0 0.0
        %807 = vmatpush1.msra.mxu0 0.0
        %808 = vmatprep.subr.mxu0 0.0
        %809 = vmatpush1.msra.mxu0 0.0
        %810 = vmatprep.subr.mxu0 0.0
        %811 = vmatpush1.msra.mxu0 0.0
        %812 = vmatprep.subr.mxu0 0.0
        %813 = vmatpush1.msra.mxu0 0.0
        %814 = vmatprep.subr.mxu0 0.0
        %815 = vmatpush1.msra.mxu0 0.0
        %816 = vmatprep.subr.mxu0 0.0
        %817 = vmatpush1.msra.mxu0 0.0
        %818 = vmatprep.subr.mxu0 0.0
        %819 = vmatpush1.msra.mxu0 0.0
        %820 = vmatprep.subr.mxu0 0.0
        %821 = vmatpush1.msra.mxu0 %v237
        %822 = vmatprep.subr.mxu0 0.0
        %823 = vmatpush1.msra.mxu0 %v236
        %824 = vmatprep.subr.mxu0 0.0
        %825 = vmatpush1.msra.mxu0 %v235
        %826 = vmatprep.subr.mxu0 0.0
        %827 = vmatpush1.msra.mxu0 %v234
        %828 = vmatprep.subr.mxu0 0.0
        %829 = vmatpush1.msra.mxu0 %v233
        %830 = vmatprep.subr.mxu0 0.0
        %831 = vmatpush1.msra.mxu0 %v232
        %832 = vmatprep.subr.mxu0 0.0
        %833 = vmatpush2.msra.mxu0 0.0
        %834 = vmatprep.subr.mxu0 0.0
        %835 = vmatpush2.msra.mxu0 0.0
        %836 = vmatprep.subr.mxu0 0.0
        %837 = vmatpush2.msra.mxu0 0.0
        %838 = vmatprep.subr.mxu0 0.0
        %839 = vmatpush2.msra.mxu0 0.0
        %840 = vmatprep.subr.mxu0 0.0
        %841 = vmatpush2.msra.mxu0 0.0
        %842 = vmatprep.subr.mxu0 0.0
        %843 = vmatpush2.msra.mxu0 0.0
        %844 = vmatprep.subr.mxu0 0.0
        %845 = vmatpush2.msra.mxu0 0.0
        %846 = vmatprep.subr.mxu0 0.0
        %847 = vmatpush2.msra.mxu0 0.0
        %848 = vmatprep.subr.mxu0 0.0
        %849 = vmatpush2.msra.mxu0 0.0
        %850 = vmatprep.subr.mxu0 0.0
        %851 = vmatpush2.msra.mxu0 0.0
        %852 = vmatprep.subr.mxu0 0.0
        %853 = vmatpush2.msra.mxu0 0.0
        %854 = vmatprep.subr.mxu0 0.0
        %855 = vmatpush2.msra.mxu0 0.0
        %856 = vmatprep.subr.mxu0 0.0
        %857 = vmatpush2.msra.mxu0 0.0
        %858 = vmatprep.subr.mxu0 0.0
        %859 = vmatpush2.msra.mxu0 0.0
        %860 = vmatprep.subr.mxu0 0.0
        %861 = vmatpush2.msra.mxu0 0.0
        %862 = vmatprep.subr.mxu0 0.0
        %863 = vmatpush2.msra.mxu0 0.0
        %864 = vmatprep.mubr.f32.mxu0 0.0
        %865 = vmatmul.mubr.f32.gmra.mxu0 %v798
        %v866 = vpop.f32.mrf.mxu0
        %v867 = vadd.f32 %v796, %v866
        %v868 = vpop.f32.mrf.mxu0
        %869 = vdwg.mxu0
        %s870 = scalar_lea.vmem %s223, 12 [#allocation5]
        %871 = vst.msk [vmem:[%s870] sm:$0xf] %vm402, %v867
        %s872 = sand.u32 %s117, 1
        %s873 = scalar_lea.sflag [#allocation4], %s872
        %s874 = sand.u32 %s117, 1
        %s875 = smul.addr %s874, 16
        %s876 = scalar_lea.vmem [#allocation5], %s875
        // Predicated region
        $region37: #{tpu_custom_call.1} parent=31 // pred_check
          %p877 = pneg %p127
        $region38: #{tpu_custom_call.1} parent=31 // pred_check_branch
          %879 = sbr.rel (%p877) target = $region40
        $region39: #{tpu_custom_call.1} parent=31 // pred_region
          %s880 = smul.u32 4, %s24
          %s882 = ssub.s32 256, 256
          %883 = vsyncadd %s873, %s882
          %s884 = smul.addr %s25, 4
          %s885 = sadd.s32 %s880, %s884
          %s886 = smul.addr %s885, 64
          %s887 = scalar_lea.hbm %s3, %s886
          %s888 = sshll.u32 %s876, 4
          %s889 = int_to_ptr.vmem [resolvable:$true] %s888
          %894 = dma.vmem_to_hbm [thread:$0]  %s889, 256, %s887, %s873, 64, 64, 4
        $region40: #{tpu_custom_call.1} parent=31 // pred_fallthru
          _
      $region32: #{tpu_custom_call.1} parent=5 // pred_fallthru
        _
      %p895 = scmp.le.s32.totalorder 2, %s15
      // Predicated region
      $region41: #{tpu_custom_call.1} parent=5 // pred_check
        %p896 = pneg %p895
      $region42: #{tpu_custom_call.1} parent=5 // pred_check_branch
        %898 = sbr.rel (%p896) target = $region44
      $region43: #{tpu_custom_call.1} parent=5 // pred_region
        %s899 = ssub.s32 %s15, 2
        // Predicated region
        $region45: #{tpu_custom_call.1} parent=43 // pred_check
          %p900 = pneg %p133
        $region46: #{tpu_custom_call.1} parent=43 // pred_check_branch
          %902 = sbr.rel (%p900) target = $region48
        $region47: #{tpu_custom_call.1} parent=43 // pred_region
          %s903 = sand.u32 %s118, 1
          %s904 = scalar_lea.sflag [#allocation4], %s903
          %s905 = sand.u32 %s118, 1
          %s906 = smul.addr %s905, 16
          %s907 = scalar_lea.vmem [#allocation5], %s906
          %908 = dma.done %s904, 256
        $region48: #{tpu_custom_call.1} parent=43 // pred_fallthru
          _
      $region44: #{tpu_custom_call.1} parent=5 // pred_fallthru
        _
    $region6: #{tpu_custom_call.1} parent=1 // loop_footer
      %s19 = sadd.s32 1, %s15
    $region7: #{tpu_custom_call.1} parent=1 // loop_footer_branch
      %14 = sbr.rel target = $region3
    $region8: #{tpu_custom_call.1} parent=1 // loop_exit
      _
    %909 = vsyncpa [#allocation3], 1
    %s910 = scalar_lea.sflag [#allocation3], 1
    %911 = vsyncpa %s910, 1
    %912 = vsyncpa [#allocation4], 1
    %s913 = scalar_lea.sflag [#allocation4], 1
    %914 = vsyncpa %s913, 1

</llo_original>
